<compile_context>
chip_gen: v6e
topology: v6e:2x2x1
jax: 0.10.0
libtpu: 0.0.40
codegen_flags: <defaults>
</compile_context>

<pallas_src>
import math
import functools  # noqa: F401  (kept for easy static-arg binding if extended)
import numpy as np

import jax
import jax.numpy as jnp
from jax import lax
from jax.experimental import pallas as pl
from jax.experimental.pallas import tpu as pltpu


# ----------------------------------------------------------------------------
# Reference rotary matrix (only used by the pure-JAX reference check)
# ----------------------------------------------------------------------------
def build_rotary_matrix(context_window, embedding_dim):
    R = np.zeros((context_window, embedding_dim, embedding_dim), dtype=np.float32)
    for position in range(context_window):
        for i in range(embedding_dim // 2):
            theta = 10000.0 ** (-2.0 * (i - 1) / embedding_dim)
            m_theta = position * theta
            R[position, 2 * i, 2 * i] = np.cos(m_theta)
            R[position, 2 * i, 2 * i + 1] = -np.sin(m_theta)
            R[position, 2 * i + 1, 2 * i] = np.sin(m_theta)
            R[position, 2 * i + 1, 2 * i + 1] = np.cos(m_theta)
    return jnp.asarray(R)


# ----------------------------------------------------------------------------
# cos / signed-sin tables (exact reference thetas, incl. the (i-1) quirk),
# tiled across heads so the kernel stays lane-dense with no in-kernel reshape.
#   q_rot[2i]   =  q[2i]*cos_i + q[2i+1]*sin_i
#   q_rot[2i+1] = -q[2i]*sin_i + q[2i+1]*cos_i
# so COS = [c0,c0,c1,c1,...], SSIN = [+s0,-s0,+s1,-s1,...] and the neighbor
# value q[partner(j)] comes from the "partner" weight columns (see below).
# ----------------------------------------------------------------------------
def _build_rope_tables(context_window, d_model, n_heads):
    i = np.arange(d_model // 2)
    theta = 10000.0 ** (-2.0 * (i - 1) / d_model)          # (i-1) quirk preserved
    ang = np.arange(context_window)[:, None] * theta[None]  # (M, D/2)
    cos = np.repeat(np.cos(ang), 2, axis=1)                  # (M, D): c0,c0,c1,c1,..
    sin = np.sin(ang)
    ssin = np.stack([sin, -sin], axis=-1).reshape(context_window, d_model)
    cos = np.tile(cos, (1, n_heads))                         # (M, H*D)
    ssin = np.tile(ssin, (1, n_heads))
    return jnp.asarray(cos, jnp.float32), jnp.asarray(ssin, jnp.float32)


def _cat_heads(W):
    # (H, D, D) -> (D, H*D), column block h == W[h]
    H, D, _ = W.shape
    return jnp.transpose(W, (1, 0, 2)).reshape(D, H * D)


# ----------------------------------------------------------------------------
# Kernel 1: fused QKV projection (all heads, + RoPE partner columns) + RoPE.
#   grid = (M // tm,)  over sequence tiles, "parallel".
#   Outputs q_rot (pre-scaled by 1/sqrt(D)), k_rot, v — all lane-dense (.., H*D).
# ----------------------------------------------------------------------------
def _qkv_rope_kernel(x_ref, w_ref, cos_ref, ssin_ref, q_ref, k_ref, v_ref):
    B, tm, D = x_ref.shape
    HD = q_ref.shape[-1]

    x = x_ref[...].astype(w_ref.dtype)                # MXU operand dtype
    # One wide matmul: columns = [Q | K | V | Q_partner | K_partner]
    proj = jnp.einsum('bmd,de->bme', x, w_ref[...],
                      preferred_element_type=jnp.float32)      # (B, tm, 5*HD)

    q = proj[..., 0 * HD:1 * HD]
    k = proj[..., 1 * HD:2 * HD]
    v = proj[..., 2 * HD:3 * HD]
    qp = proj[..., 3 * HD:4 * HD]                     # q with pair-swapped columns
    kp = proj[..., 4 * HD:5 * HD]                     # k with pair-swapped columns

    cos = cos_ref[...][None]                          # (1, tm, HD), f32
    ssin = ssin_ref[...][None]

    scale = 1.0 / math.sqrt(D)                        # fold 1/sqrt(d_model) into q
    q_ref[...] = ((q * cos + qp * ssin) * scale).astype(q_ref.dtype)
    k_ref[...] = (k * cos + kp * ssin).astype(k_ref.dtype)
    v_ref[...] = v.astype(v_ref.dtype)


# ----------------------------------------------------------------------------
# Kernel 2: causal attention (per head) + fused output projection + bias.
#   grid = (M // tq,) over query tiles, "parallel".  K/V kept whole (small
#   context_window); for long sequences stream K/V as an "arbitrary" axis.
# ----------------------------------------------------------------------------
def _attn_out_proj_kernel(q_ref, k_ref, v_ref, wo_ref, bo_ref, o_ref):
    B, tq, HD = q_ref.shape
    M = k_ref.shape[1]
    Dm = o_ref.shape[-1]                              # d_model (== per-head dim here)
    H = HD // Dm

    # Causal mask for this query tile — hoisted out of the per-head loop.
    q_start = pl.program_id(0) * tq
    row = q_start + lax.broadcasted_iota(jnp.int32, (tq, M), 0)
    col = lax.broadcasted_iota(jnp.int32, (tq, M), 1)
    causal = (col <= row)[None]                       # (1, tq, M)

    q = q_ref[...]                                    # already scaled by 1/sqrt(D)
    k = k_ref[...]
    v = v_ref[...]

    head_outs = []
    for h in range(H):                                # static unroll over heads
        sl = slice(h * Dm, (h + 1) * Dm)
        s = jnp.einsum('bqd,bkd->bqk', q[..., sl], k[..., sl],
                       preferred_element_type=jnp.float32)     # (B, tq, M), f32
        s = jnp.where(causal, s, jnp.float32(-1e30))
        m = jnp.max(s, axis=-1, keepdims=True)
        p = jnp.exp(s - m)
        denom = jnp.sum(p, axis=-1, keepdims=True)
        p = p * pl.reciprocal(denom, approx=True)     # EUP slot, ~free
        # TODO(synk): SDPA dropout_p=0.1 (training-mode) has no deterministic
        # equivalent; eval-mode identity is used here.
        head_outs.append(
            jnp.einsum('bqk,bkd->bqd', p.astype(v.dtype), v[..., sl],
                       preferred_element_type=jnp.float32))

    o_cat = jnp.concatenate(head_outs, axis=-1)       # (B, tq, H*D), f32, lane-dense
    out = jnp.einsum('bqe,ef->bqf', o_cat.astype(wo_ref.dtype), wo_ref[...],
                     preferred_element_type=jnp.float32)
    # TODO(synk): final nn.Dropout(0.1) (training mode) omitted — eval identity.
    o_ref[...] = out + bo_ref[...][None]


# ----------------------------------------------------------------------------
# Wrapper
# ----------------------------------------------------------------------------
def rope_mha_forward(x, Wq, Wk, Wv, Wo, bo, *,
                     seq_tile=128, compute_dtype=jnp.float32):
    """x: (B, M, D); Wq/Wk/Wv: (H, D, D) pre-transposed (q = x @ Wq[h]);
    Wo: (H*D, D); bo: (D,).  compute_dtype=jnp.bfloat16 recommended on v6e/v7x."""
    B, M, D = x.shape
    H = Wq.shape[0]
    HD = H * D

    tm = min(seq_tile, M)
    if M % tm != 0:
        tm = M
    n_tiles = M // tm

    # RoPE tables + fused projection weight with "partner" columns:
    #   partner(2i) = 2i+1, partner(2i+1) = 2i  ->  (x @ W[:, partner]) = swap(q).
    cos_tbl, ssin_tbl = _build_rope_tables(M, D, H)
    perm = np.arange(D).reshape(-1, 2)[:, ::-1].reshape(-1)
    w_fused = jnp.concatenate(
        [_cat_heads(Wq), _cat_heads(Wk), _cat_heads(Wv),
         _cat_heads(Wq[:, :, perm]), _cat_heads(Wk[:, :, perm])],
        axis=1).astype(compute_dtype)                            # (D, 5*HD)
    wo = Wo.astype(compute_dtype)                                # (HD, D)
    bo2 = bo.reshape(1, D).astype(jnp.float32)

    # ---- Kernel 1: fused QKV + RoPE, tiled over sequence ----
    q_rot, k_rot, v_all = pl.pallas_call(
        _qkv_rope_kernel,
        out_shape=(
            jax.ShapeDtypeStruct((B, M, HD), compute_dtype),
            jax.ShapeDtypeStruct((B, M, HD), compute_dtype),
            jax.ShapeDtypeStruct((B, M, HD), compute_dtype),
        ),
        grid=(n_tiles,),
        in_specs=[
            pl.BlockSpec((B, tm, D), lambda i: (0, i, 0)),
            pl.BlockSpec((D, 5 * HD), lambda i: (0, 0)),
            pl.BlockSpec((tm, HD), lambda i: (i, 0)),
            pl.BlockSpec((tm, HD), lambda i: (i, 0)),
        ],
        out_specs=(
            pl.BlockSpec((B, tm, HD), lambda i: (0, i, 0)),
            pl.BlockSpec((B, tm, HD), lambda i: (0, i, 0)),
            pl.BlockSpec((B, tm, HD), lambda i: (0, i, 0)),
        ),
        compiler_params=pltpu.CompilerParams(dimension_semantics=("parallel",)),
    )(x, w_fused, cos_tbl, ssin_tbl)

    # ---- Kernel 2: attention + fused output projection, tiled over queries ----
    out = pl.pallas_call(
        _attn_out_proj_kernel,
        out_shape=jax.ShapeDtypeStruct((B, M, D), jnp.float32),
        grid=(n_tiles,),
        in_specs=[
            pl.BlockSpec((B, tm, HD), lambda i: (0, i, 0)),
            pl.BlockSpec((B, M, HD), lambda i: (0, 0, 0)),
            pl.BlockSpec((B, M, HD), lambda i: (0, 0, 0)),
            pl.BlockSpec((HD, D), lambda i: (0, 0)),
            pl.BlockSpec((1, D), lambda i: (0, 0)),
        ],
        out_specs=pl.BlockSpec((B, tm, D), lambda i: (0, i, 0)),
        compiler_params=pltpu.CompilerParams(dimension_semantics=("parallel",)),
    )(q_rot, k_rot, v_all, wo, bo2)
    return out


# ----------------------------------------------------------------------------
# Pure-JAX reference (mirrors the PyTorch forward, eval mode, rotary MATRIX form)
# ----------------------------------------------------------------------------
def reference(x, Wq, Wk, Wv, R, Wo, bo):
    B, M, D = x.shape
    heads = []
    for h in range(Wq.shape[0]):
        q = x @ Wq[h]
        k = x @ Wk[h]
        v = x @ Wv[h]
        q_rot = jnp.einsum('bmd,mde->bme', q, R)
        k_rot = jnp.einsum('bmd,mde->bme', k, R)
        scores = jnp.einsum('bqd,bkd->bqk', q_rot, k_rot) / math.sqrt(D)
        mask = jnp.tril(jnp.ones((M, M), dtype=bool))
        scores = jnp.where(mask[None], scores, -jnp.inf)
        w = jax.nn.softmax(scores, axis=-1)
        heads.append(jnp.einsum('bqk,bkd->bqd', w, v))
    cat = jnp.concatenate(heads, axis=-1)
    return cat @ Wo + bo


if __name__ == "__main__":
    # Small shapes consistent with the module: batch=2, context_window=16,
    # d_model=32, n_heads=4  (H*D = 128 -> lane-dense intermediates).
    B, M, D, H = 2, 16, 32, 4

    key = jax.random.PRNGKey(0)
    ks = jax.random.split(key, 6)
    x = jax.random.normal(ks[0], (B, M, D), jnp.float32)
    Wq = jax.random.normal(ks[1], (H, D, D), jnp.float32) * 0.05
    Wk = jax.random.normal(ks[2], (H, D, D), jnp.float32) * 0.05
    Wv = jax.random.normal(ks[3], (H, D, D), jnp.float32) * 0.05
    Wo = jax.random.normal(ks[4], (H * D, D), jnp.float32) * 0.05
    bo = jax.random.normal(ks[5], (D,), jnp.float32) * 0.05

    # f32 compute path (seq_tile=8 -> 2-step "parallel" grid at these shapes).
    out = jax.block_until_ready(
        rope_mha_forward(x, Wq, Wk, Wv, Wo, bo, seq_tile=8,
                         compute_dtype=jnp.float32))
    ref = reference(x, Wq, Wk, Wv, build_rotary_matrix(M, D), Wo, bo)
    assert out.shape == (B, M, D), out.shape
    np.testing.assert_allclose(np.asarray(out), np.asarray(ref),
                               rtol=2e-3, atol=2e-3)

    # bf16 MXU-operand path (recommended on v6e/v7x); loose sanity check only.
    out_bf16 = jax.block_until_ready(
        rope_mha_forward(x, Wq, Wk, Wv, Wo, bo, seq_tile=8,
                         compute_dtype=jnp.bfloat16))
    np.testing.assert_allclose(np.asarray(out_bf16), np.asarray(ref),
                               rtol=6e-2, atol=6e-2)

    print("KERNEL_OK")
</pallas_src>

<mosaic_0001>
module attributes {stable_mosaic.version = 11 : i64} {
  func.func @_qkv_rope_kernel(%arg0: i32, %arg1: memref<2x8x32xf32, #tpu.memory_space<vmem>>, %arg2: memref<32x640xf32, #tpu.memory_space<vmem>>, %arg3: memref<8x128xf32, #tpu.memory_space<vmem>>, %arg4: memref<8x128xf32, #tpu.memory_space<vmem>>, %arg5: memref<2x8x128xf32, #tpu.memory_space<vmem>>, %arg6: memref<2x8x128xf32, #tpu.memory_space<vmem>>, %arg7: memref<2x8x128xf32, #tpu.memory_space<vmem>>) attributes {dimension_semantics = [#tpu.dimension_semantics<parallel>], iteration_bounds = array<i64: 2>, scalar_prefetch = 0 : i64, scratch_operands = 0 : i64, tpu.core_type = #tpu.core_type<tc>, window_params = [{transform_indices = @transform_0, window_bounds = array<i64: 2, 8, 32>}, {pipeline_mode = #tpu.pipeline_mode<synchronous>, transform_indices = @transform_1, window_bounds = array<i64: 32, 640>}, {transform_indices = @transform_2, window_bounds = array<i64: 8, 128>}, {transform_indices = @transform_3, window_bounds = array<i64: 8, 128>}, {transform_indices = @transform_4, window_bounds = array<i64: 2, 8, 128>}, {transform_indices = @transform_5, window_bounds = array<i64: 2, 8, 128>}, {transform_indices = @transform_6, window_bounds = array<i64: 2, 8, 128>}]} {
    %c0 = arith.constant 0 : index
    %c0_0 = arith.constant 0 : index
    %c0_1 = arith.constant 0 : index
    %0 = vector.load %arg1[%c0, %c0_0, %c0_1] : memref<2x8x32xf32, #tpu.memory_space<vmem>>, vector<2x8x32xf32>
    %c0_2 = arith.constant 0 : index
    %c0_3 = arith.constant 0 : index
    %1 = vector.load %arg2[%c0_2, %c0_3] : memref<32x640xf32, #tpu.memory_space<vmem>>, vector<32x640xf32>
    "tpu.trace_start"() <{level = 10 : i32, message = "bmd,de->bme"}> : () -> ()
    %cst = arith.constant dense<0.000000e+00> : vector<2x8x640xf32>
    %2 = tpu.matmul %0, %1, %cst {dimension_numbers = #tpu.dot_dimension_numbers<[2], [0], [0, 1], [1], [0, 0, 0, 1, 1, 1], [], []>} : vector<2x8x32xf32>, vector<32x640xf32>, vector<2x8x640xf32> -> vector<2x8x640xf32>
    "tpu.trace_stop"() : () -> ()
    %3 = vector.extract_strided_slice %2 {offsets = [0, 0, 0], sizes = [2, 8, 128], strides = [1, 1, 1]} : vector<2x8x640xf32> to vector<2x8x128xf32>
    %4 = vector.extract_strided_slice %2 {offsets = [0, 0, 128], sizes = [2, 8, 128], strides = [1, 1, 1]} : vector<2x8x640xf32> to vector<2x8x128xf32>
    %5 = vector.extract_strided_slice %2 {offsets = [0, 0, 256], sizes = [2, 8, 128], strides = [1, 1, 1]} : vector<2x8x640xf32> to vector<2x8x128xf32>
    %6 = vector.extract_strided_slice %2 {offsets = [0, 0, 384], sizes = [2, 8, 128], strides = [1, 1, 1]} : vector<2x8x640xf32> to vector<2x8x128xf32>
    %7 = vector.extract_strided_slice %2 {offsets = [0, 0, 512], sizes = [2, 8, 128], strides = [1, 1, 1]} : vector<2x8x640xf32> to vector<2x8x128xf32>
    %c0_4 = arith.constant 0 : index
    %c0_5 = arith.constant 0 : index
    %8 = vector.load %arg3[%c0_4, %c0_5] : memref<8x128xf32, #tpu.memory_space<vmem>>, vector<8x128xf32>
    %9 = vector.shape_cast %8 : vector<8x128xf32> to vector<1x8x128xf32>
    %c0_6 = arith.constant 0 : index
    %c0_7 = arith.constant 0 : index
    %10 = vector.load %arg4[%c0_6, %c0_7] : memref<8x128xf32, #tpu.memory_space<vmem>>, vector<8x128xf32>
    %11 = vector.shape_cast %10 : vector<8x128xf32> to vector<1x8x128xf32>
    %12 = vector.broadcast %9 : vector<1x8x128xf32> to vector<2x8x128xf32>
    %13 = arith.mulf %3, %12 : vector<2x8x128xf32>
    %14 = vector.broadcast %11 : vector<1x8x128xf32> to vector<2x8x128xf32>
    %15 = arith.mulf %6, %14 : vector<2x8x128xf32>
    %16 = arith.addf %13, %15 : vector<2x8x128xf32>
    %cst_8 = arith.constant 0.176776692 : f32
    %17 = vector.broadcast %cst_8 : f32 to vector<2x8x128xf32>
    %18 = arith.mulf %16, %17 : vector<2x8x128xf32>
    %c0_9 = arith.constant 0 : index
    %c0_10 = arith.constant 0 : index
    %c0_11 = arith.constant 0 : index
    %19 = vector.load %arg5[%c0_9, %c0_10, %c0_11] : memref<2x8x128xf32, #tpu.memory_space<vmem>>, vector<2x8x128xf32>
    tpu.vector_store %arg5[%c0_9, %c0_10, %c0_11], %18 {strides = array<i32>} : memref<2x8x128xf32, #tpu.memory_space<vmem>>, vector<2x8x128xf32>,
    %20 = vector.broadcast %9 : vector<1x8x128xf32> to vector<2x8x128xf32>
    %21 = arith.mulf %4, %20 : vector<2x8x128xf32>
    %22 = vector.broadcast %11 : vector<1x8x128xf32> to vector<2x8x128xf32>
    %23 = arith.mulf %7, %22 : vector<2x8x128xf32>
    %24 = arith.addf %21, %23 : vector<2x8x128xf32>
    %c0_12 = arith.constant 0 : index
    %c0_13 = arith.constant 0 : index
    %c0_14 = arith.constant 0 : index
    %25 = vector.load %arg6[%c0_12, %c0_13, %c0_14] : memref<2x8x128xf32, #tpu.memory_space<vmem>>, vector<2x8x128xf32>
    tpu.vector_store %arg6[%c0_12, %c0_13, %c0_14], %24 {strides = array<i32>} : memref<2x8x128xf32, #tpu.memory_space<vmem>>, vector<2x8x128xf32>,
    %c0_15 = arith.constant 0 : index
    %c0_16 = arith.constant 0 : index
    %c0_17 = arith.constant 0 : index
    %26 = vector.load %arg7[%c0_15, %c0_16, %c0_17] : memref<2x8x128xf32, #tpu.memory_space<vmem>>, vector<2x8x128xf32>
    tpu.vector_store %arg7[%c0_15, %c0_16, %c0_17], %5 {strides = array<i32>} : memref<2x8x128xf32, #tpu.memory_space<vmem>>, vector<2x8x128xf32>,
    return
  }
  func.func @transform_0(%arg0: i32) -> (i32, i32, i32) {
    %c0_i32 = arith.constant 0 : i32
    %c0_i32_0 = arith.constant 0 : i32
    %c0_i32_1 = arith.constant 0 : i32
    return %c0_i32, %arg0, %c0_i32_0 : i32, i32, i32
  }
  func.func @transform_1(%arg0: i32) -> (i32, i32) {
    %c0_i32 = arith.constant 0 : i32
    %c0_i32_0 = arith.constant 0 : i32
    %c0_i32_1 = arith.constant 0 : i32
    return %c0_i32, %c0_i32_0 : i32, i32
  }
  func.func @transform_2(%arg0: i32) -> (i32, i32) {
    %c0_i32 = arith.constant 0 : i32
    %c0_i32_0 = arith.constant 0 : i32
    return %arg0, %c0_i32 : i32, i32
  }
  func.func @transform_3(%arg0: i32) -> (i32, i32) {
    %c0_i32 = arith.constant 0 : i32
    %c0_i32_0 = arith.constant 0 : i32
    return %arg0, %c0_i32 : i32, i32
  }
  func.func @transform_4(%arg0: i32) -> (i32, i32, i32) {
    %c0_i32 = arith.constant 0 : i32
    %c0_i32_0 = arith.constant 0 : i32
    %c0_i32_1 = arith.constant 0 : i32
    return %c0_i32, %arg0, %c0_i32_0 : i32, i32, i32
  }
  func.func @transform_5(%arg0: i32) -> (i32, i32, i32) {
    %c0_i32 = arith.constant 0 : i32
    %c0_i32_0 = arith.constant 0 : i32
    %c0_i32_1 = arith.constant 0 : i32
    return %c0_i32, %arg0, %c0_i32_0 : i32, i32, i32
  }
  func.func @transform_6(%arg0: i32) -> (i32, i32, i32) {
    %c0_i32 = arith.constant 0 : i32
    %c0_i32_0 = arith.constant 0 : i32
    %c0_i32_1 = arith.constant 0 : i32
    return %c0_i32, %arg0, %c0_i32_0 : i32, i32, i32
  }
}

</mosaic_0001>

<llo_original>
// kernel: tpu_custom_call.1
$region0: #{tpu_custom_call.1}
  #allocation0 [shape = 'u32[]', space=smem, size = 0x4, offset = 0x4, fixed_abs, tag = 'smem constant byte address 0x4 - core index']
  #allocation1 [shape = 'u32[144,128]{1,0:T(1,128)}', space=vmem, size = 0x12000, scoped, tag = 'internal scratch']
  %s0 = inlined_call_operand.hbm [shape: f32[2,16,32], index: 0, kind: input, shape index: {}]
  %s1 = inlined_call_operand.hbm [shape: f32[32,640], index: 1, kind: input, shape index: {}]
  %s2 = inlined_call_operand.hbm [shape: f32[16,128], index: 2, kind: input, shape index: {}]
  %s3 = inlined_call_operand.hbm [shape: f32[16,128], index: 3, kind: input, shape index: {}]
  %s4 = inlined_call_operand.hbm [shape: f32[2,16,128], index: 4, kind: output, shape index: {0}]
  %s5 = inlined_call_operand.hbm [shape: f32[2,16,128], index: 5, kind: output, shape index: {1}]
  %s6 = inlined_call_operand.hbm [shape: f32[2,16,128], index: 6, kind: output, shape index: {2}]
  %7 = xla_tuple %s4, %s5, %s6
  %s8 = sld [smem:[#allocation0]]
  $region81: #{tpu_custom_call.1} parent=0
    _
  %s10 = ssub.s32 1, %s8
  %s11 = scalar_select 0, %s10, %s8
  $region1: #{tpu_custom_call.1} parent=0
    #allocation2 [shape = 'u8[16384]{0}', space=vmem, size = 0x4000, scoped, tag = 'input window, operand 0']
    #allocation3 [shape = 's32[2]{0}', space=sflag, size = 0x8, scoped, tag = 'scoped memory for tpu_custom_call.1']
    #allocation4 [shape = 's32[2]{0}', space=sflag, size = 0x8, scoped, tag = 'scoped memory for tpu_custom_call.1']
    #allocation5 [shape = 'u8[81920]{0}', space=vmem, size = 0x14000, scoped, tag = 'input window, operand 1, single buffered']
    #allocation6 [shape = 's32[1]{0}', space=sflag, size = 0x4, scoped, tag = 'scoped memory for tpu_custom_call.1']
    #allocation7 [shape = 'u8[8192]{0}', space=vmem, size = 0x2000, scoped, tag = 'input window, operand 2']
    #allocation8 [shape = 'u8[8192]{0}', space=vmem, size = 0x2000, scoped, tag = 'input window, operand 3']
    #allocation9 [shape = 'u8[16384]{0}', space=vmem, size = 0x4000, scoped, tag = 'output window, operand 0']
    #allocation10 [shape = 'u8[16384]{0}', space=vmem, size = 0x4000, scoped, tag = 'output window, operand 1']
    #allocation11 [shape = 's32[2]{0}', space=sflag, size = 0x8, scoped, tag = 'scoped memory for tpu_custom_call.1']
    #allocation12 [shape = 'u8[16384]{0}', space=vmem, size = 0x4000, scoped, tag = 'output window, operand 2']
    %12 = vsyncpa [#allocation3], 0
    %s13 = scalar_lea.sflag [#allocation3], 1
    %14 = vsyncpa %s13, 0
    %15 = vsyncpa [#allocation6], 0
    %16 = vsyncpa [#allocation4], 0
    %s17 = scalar_lea.sflag [#allocation4], 1
    %18 = vsyncpa %s17, 0
    %19 = vsyncpa [#allocation11], 0
    %s20 = scalar_lea.sflag [#allocation11], 1
    %21 = vsyncpa %s20, 0
    loop: start=0, step=1, limit=4
    $region2: #{tpu_custom_call.1} parent=1 // loop_pre_header
      _
    $region3: #{tpu_custom_call.1} parent=1 // loop_header
      %s23 = sphi 0, %s27
      %p24 = scmp.ge.s32.totalorder %s23, 4
      %s33 = sphi 0, %s35
      %s36 = sphi 0, %s33
      %s37 = sphi 0, %s36
      %s53 = sphi 0, %s37
      %s57 = sphi 0, %s57
      %s59 = sphi 0, %s57
      %s60 = sphi 0, %s59
      %s74 = sphi 0, %s60
      %s80 = sphi 0, %s82
      %s83 = sphi 0, %s80
      %s84 = sphi 0, %s83
      %s100 = sphi 0, %s84
      %s106 = sphi 0, %s108
      %s109 = sphi 0, %s106
      %s110 = sphi 0, %s109
      %s126 = sphi 0, %s110
      %s132 = sphi 0, %s134
      %s135 = sphi 0, %s132
      %s136 = sphi 0, %s135
      %s152 = sphi 0, %s136
      %s158 = sphi 0, %s160
      %s161 = sphi 0, %s158
      %s162 = sphi 0, %s161
      %s178 = sphi 0, %s162
      %s184 = sphi 0, %s186
      %s187 = sphi 0, %s184
      %s188 = sphi 0, %s187
      %s204 = sphi 0, %s188
    $region4: #{tpu_custom_call.1} parent=1 // loop_header_branch
      %26 = sbr.rel (%p24) target = $region8
    $region5: #{tpu_custom_call.1} parent=1 // loop_body
      %s28 = ssub.s32 %s23, 1
      %s29 = ssub.s32 %s23, 2
      %s30 = sadd.s32 %s23, 1
      %s31 = ssub.s32 %s23, %s30
      %p32 = scmp.eq.s32.totalorder %s31, 0
      %s34 = sadd.s32 %s33, 1
      %s35 = scalar_select %p32, %s33, %s34
      %p38 = pneg %p32
      %p39 = scmp.eq.s32.totalorder %s23, 1
      %p40 = por %p38, %p39
      %p41 = scmp.ne.s32.totalorder %s33, %s36
      %p42 = scmp.eq.s32.totalorder %s23, 0
      %p43 = por %p41, %p42
      %p44 = scmp.ne.s32.totalorder %s33, %s36
      %p45 = scmp.eq.s32.totalorder %s28, 1
      %p46 = por %p44, %p45
      %p47 = scmp.ne.s32.totalorder %s36, %s37
      %p48 = scmp.eq.s32.totalorder %s28, 0
      %p49 = por %p47, %p48
      %p50 = scmp.ne.s32.totalorder %s36, %s37
      %p51 = scmp.eq.s32.totalorder %s29, 1
      %p52 = por %p50, %p51
      %p54 = scmp.ne.s32.totalorder %s37, %s53
      %p55 = scmp.eq.s32.totalorder %s29, 0
      %p56 = por %p54, %p55
      %s58 = sadd.s32 %s57, 1
      %p61 = scmp.eq.s32.totalorder %s23, 1
      %p62 = scmp.ne.s32.totalorder %s57, %s59
      %p63 = scmp.eq.s32.totalorder %s23, 0
      %p64 = por %p62, %p63
      %p65 = scmp.ne.s32.totalorder %s57, %s59
      %p66 = scmp.eq.s32.totalorder %s28, 1
      %p67 = por %p65, %p66
      %p68 = scmp.ne.s32.totalorder %s59, %s60
      %p69 = scmp.eq.s32.totalorder %s28, 0
      %p70 = por %p68, %p69
      %p71 = scmp.ne.s32.totalorder %s59, %s60
      %p72 = scmp.eq.s32.totalorder %s29, 1
      %p73 = por %p71, %p72
      %p75 = scmp.ne.s32.totalorder %s60, %s74
      %p76 = scmp.eq.s32.totalorder %s29, 0
      %p77 = por %p75, %p76
      %s78 = ssub.s32 %s23, %s30
      %p79 = scmp.eq.s32.totalorder %s78, 0
      %s81 = sadd.s32 %s80, 1
      %s82 = scalar_select %p79, %s80, %s81
      %p85 = pneg %p79
      %p86 = scmp.eq.s32.totalorder %s23, 1
      %p87 = por %p85, %p86
      %p88 = scmp.ne.s32.totalorder %s80, %s83
      %p89 = scmp.eq.s32.totalorder %s23, 0
      %p90 = por %p88, %p89
      %p91 = scmp.ne.s32.totalorder %s80, %s83
      %p92 = scmp.eq.s32.totalorder %s28, 1
      %p93 = por %p91, %p92
      %p94 = scmp.ne.s32.totalorder %s83, %s84
      %p95 = scmp.eq.s32.totalorder %s28, 0
      %p96 = por %p94, %p95
      %p97 = scmp.ne.s32.totalorder %s83, %s84
      %p98 = scmp.eq.s32.totalorder %s29, 1
      %p99 = por %p97, %p98
      %p101 = scmp.ne.s32.totalorder %s84, %s100
      %p102 = scmp.eq.s32.totalorder %s29, 0
      %p103 = por %p101, %p102
      %s104 = ssub.s32 %s23, %s30
      %p105 = scmp.eq.s32.totalorder %s104, 0
      %s107 = sadd.s32 %s106, 1
      %s108 = scalar_select %p105, %s106, %s107
      %p111 = pneg %p105
      %p112 = scmp.eq.s32.totalorder %s23, 1
      %p113 = por %p111, %p112
      %p114 = scmp.ne.s32.totalorder %s106, %s109
      %p115 = scmp.eq.s32.totalorder %s23, 0
      %p116 = por %p114, %p115
      %p117 = scmp.ne.s32.totalorder %s106, %s109
      %p118 = scmp.eq.s32.totalorder %s28, 1
      %p119 = por %p117, %p118
      %p120 = scmp.ne.s32.totalorder %s109, %s110
      %p121 = scmp.eq.s32.totalorder %s28, 0
      %p122 = por %p120, %p121
      %p123 = scmp.ne.s32.totalorder %s109, %s110
      %p124 = scmp.eq.s32.totalorder %s29, 1
      %p125 = por %p123, %p124
      %p127 = scmp.ne.s32.totalorder %s110, %s126
      %p128 = scmp.eq.s32.totalorder %s29, 0
      %p129 = por %p127, %p128
      %s130 = ssub.s32 %s23, %s30
      %p131 = scmp.eq.s32.totalorder %s130, 0
      %s133 = sadd.s32 %s132, 1
      %s134 = scalar_select %p131, %s132, %s133
      %p137 = pneg %p131
      %p138 = scmp.eq.s32.totalorder %s23, 1
      %p139 = por %p137, %p138
      %p140 = scmp.ne.s32.totalorder %s132, %s135
      %p141 = scmp.eq.s32.totalorder %s23, 0
      %p142 = por %p140, %p141
      %p143 = scmp.ne.s32.totalorder %s132, %s135
      %p144 = scmp.eq.s32.totalorder %s28, 1
      %p145 = por %p143, %p144
      %p146 = scmp.ne.s32.totalorder %s135, %s136
      %p147 = scmp.eq.s32.totalorder %s28, 0
      %p148 = por %p146, %p147
      %p149 = scmp.ne.s32.totalorder %s135, %s136
      %p150 = scmp.eq.s32.totalorder %s29, 1
      %p151 = por %p149, %p150
      %p153 = scmp.ne.s32.totalorder %s136, %s152
      %p154 = scmp.eq.s32.totalorder %s29, 0
      %p155 = por %p153, %p154
      %s156 = ssub.s32 %s23, %s30
      %p157 = scmp.eq.s32.totalorder %s156, 0
      %s159 = sadd.s32 %s158, 1
      %s160 = scalar_select %p157, %s158, %s159
      %p163 = pneg %p157
      %p164 = scmp.eq.s32.totalorder %s23, 1
      %p165 = por %p163, %p164
      %p166 = scmp.ne.s32.totalorder %s158, %s161
      %p167 = scmp.eq.s32.totalorder %s23, 0
      %p168 = por %p166, %p167
      %p169 = scmp.ne.s32.totalorder %s158, %s161
      %p170 = scmp.eq.s32.totalorder %s28, 1
      %p171 = por %p169, %p170
      %p172 = scmp.ne.s32.totalorder %s161, %s162
      %p173 = scmp.eq.s32.totalorder %s28, 0
      %p174 = por %p172, %p173
      %p175 = scmp.ne.s32.totalorder %s161, %s162
      %p176 = scmp.eq.s32.totalorder %s29, 1
      %p177 = por %p175, %p176
      %p179 = scmp.ne.s32.totalorder %s162, %s178
      %p180 = scmp.eq.s32.totalorder %s29, 0
      %p181 = por %p179, %p180
      %s182 = ssub.s32 %s23, %s30
      %p183 = scmp.eq.s32.totalorder %s182, 0
      %s185 = sadd.s32 %s184, 1
      %s186 = scalar_select %p183, %s184, %s185
      %p189 = pneg %p183
      %p190 = scmp.eq.s32.totalorder %s23, 1
      %p191 = por %p189, %p190
      %p192 = scmp.ne.s32.totalorder %s184, %s187
      %p193 = scmp.eq.s32.totalorder %s23, 0
      %p194 = por %p192, %p193
      %p195 = scmp.ne.s32.totalorder %s184, %s187
      %p196 = scmp.eq.s32.totalorder %s28, 1
      %p197 = por %p195, %p196
      %p198 = scmp.ne.s32.totalorder %s187, %s188
      %p199 = scmp.eq.s32.totalorder %s28, 0
      %p200 = por %p198, %p199
      %p201 = scmp.ne.s32.totalorder %s187, %s188
      %p202 = scmp.eq.s32.totalorder %s29, 1
      %p203 = por %p201, %p202
      %p205 = scmp.ne.s32.totalorder %s188, %s204
      %p206 = scmp.eq.s32.totalorder %s29, 0
      %p207 = por %p205, %p206
      %p208 = scmp.le.s32.totalorder 1, %s23
      %p209 = scmp.lt.s32.totalorder %s23, 3
      %p210 = pnand %p208, %p209
      %p211 = pneg %p210
      // Predicated region
      $region9: #{tpu_custom_call.1} parent=5 // pred_check
        _
      $region10: #{tpu_custom_call.1} parent=5 // pred_check_branch
        %213 = sbr.rel (%p210) target = $region12
      $region11: #{tpu_custom_call.1} parent=5 // pred_region
        %s214 = ssub.s32 %s23, 1
        // Predicated region
        $region13: #{tpu_custom_call.1} parent=11 // pred_check
          %p215 = pneg %p70
        $region14: #{tpu_custom_call.1} parent=11 // pred_check_branch
          %217 = sbr.rel (%p215) target = $region16
        $region15: #{tpu_custom_call.1} parent=11 // pred_region
          %s219 = ssub.s32 2560, 2560
          %220 = vsyncadd [#allocation6], %s219
          %s221 = sshll.u32 [#allocation5], 4
          %s222 = int_to_ptr.vmem [resolvable:$true] %s221
          %227 = dma.hbm_to_vmem [thread:$0]  %s1, 2560, %s222, [#allocation6], 640, 640, 40
        $region16: #{tpu_custom_call.1} parent=11 // pred_fallthru
          _
      $region12: #{tpu_custom_call.1} parent=5 // pred_fallthru
        _
      %p228 = scmp.lt.s32.totalorder %s23, 2
      // Predicated region
      $region17: #{tpu_custom_call.1} parent=5 // pred_check
        %p229 = pneg %p228
      $region18: #{tpu_custom_call.1} parent=5 // pred_check_branch
        %231 = sbr.rel (%p229) target = $region20
      $region19: #{tpu_custom_call.1} parent=5 // pred_region
        // Predicated region
        $region21: #{tpu_custom_call.1} parent=19 // pred_check
          %p232 = pneg %p43
        $region22: #{tpu_custom_call.1} parent=19 // pred_check_branch
          %234 = sbr.rel (%p232) target = $region24
        $region23: #{tpu_custom_call.1} parent=19 // pred_region
          %s235 = sand.u32 %s23, 1
          %s236 = scalar_lea.sflag [#allocation3], %s235
          %s237 = sand.u32 %s33, 1
          %s238 = smul.addr %s237, 16
          %s239 = scalar_lea.vmem [#allocation2], %s238
          %s241 = ssub.s32 256, 256
          %242 = vsyncadd %s236, %s241
          %s243 = smul.addr %s23, 128
          %s244 = scalar_lea.hbm %s0, %s243
          %s245 = sshll.u32 %s239, 4
          %s246 = int_to_ptr.vmem [resolvable:$true] %s245
          %251 = dma.hbm_to_vmem [thread:$0]  %s244, 256, %s246, %s236, 256, 128, 8
        $region24: #{tpu_custom_call.1} parent=19 // pred_fallthru
          _
        // Predicated region
        $region25: #{tpu_custom_call.1} parent=19 // pred_check
          %p252 = pneg %p90
        $region26: #{tpu_custom_call.1} parent=19 // pred_check_branch
          %254 = sbr.rel (%p252) target = $region28
        $region27: #{tpu_custom_call.1} parent=19 // pred_region
          %s255 = sand.u32 %s23, 1
          %s256 = scalar_lea.sflag [#allocation3], %s255
          %s257 = sand.u32 %s80, 1
          %s258 = smul.addr %s257, 8
          %s259 = scalar_lea.vmem [#allocation7], %s258
          %s261 = ssub.s32 128, 128
          %262 = vsyncadd %s256, %s261
          %s263 = smul.addr %s23, 128
          %s264 = scalar_lea.hbm %s2, %s263
          %s266 = sshll.u32 %s259, 4
          %s267 = int_to_ptr.vmem [resolvable:$true] %s266
          %269 = dma.hbm_to_vmem [thread:$0]  %s264, 128, %s267, %s256
        $region28: #{tpu_custom_call.1} parent=19 // pred_fallthru
          _
        // Predicated region
        $region29: #{tpu_custom_call.1} parent=19 // pred_check
          %p270 = pneg %p116
        $region30: #{tpu_custom_call.1} parent=19 // pred_check_branch
          %272 = sbr.rel (%p270) target = $region32
        $region31: #{tpu_custom_call.1} parent=19 // pred_region
          %s273 = sand.u32 %s23, 1
          %s274 = scalar_lea.sflag [#allocation3], %s273
          %s275 = sand.u32 %s106, 1
          %s276 = smul.addr %s275, 8
          %s277 = scalar_lea.vmem [#allocation8], %s276
          %s279 = ssub.s32 128, 128
          %280 = vsyncadd %s274, %s279
          %s281 = smul.addr %s23, 128
          %s282 = scalar_lea.hbm %s3, %s281
          %s284 = sshll.u32 %s277, 4
          %s285 = int_to_ptr.vmem [resolvable:$true] %s284
          %287 = dma.hbm_to_vmem [thread:$0]  %s282, 128, %s285, %s274
        $region32: #{tpu_custom_call.1} parent=19 // pred_fallthru
          _
      $region20: #{tpu_custom_call.1} parent=5 // pred_fallthru
        _
      %p288 = scmp.le.s32.totalorder 1, %s23
      %p289 = scmp.lt.s32.totalorder %s23, 3
      %p290 = pnand %p288, %p289
      %p291 = pneg %p290
      // Predicated region
      $region33: #{tpu_custom_call.1} parent=5 // pred_check
        _
      $region34: #{tpu_custom_call.1} parent=5 // pred_check_branch
        %293 = sbr.rel (%p290) target = $region36
      $region35: #{tpu_custom_call.1} parent=5 // pred_region
        %s294 = ssub.s32 %s23, 1
        %s295 = sand.u32 %s28, 1
        %s296 = scalar_lea.sflag [#allocation3], %s295
        %s297 = sand.u32 %s36, 1
        %s298 = smul.addr %s297, 16
        %s299 = scalar_lea.vmem [#allocation2], %s298
        // Predicated region
        $region37: #{tpu_custom_call.1} parent=35 // pred_check
          %p300 = pneg %p49
        $region38: #{tpu_custom_call.1} parent=35 // pred_check_branch
          %302 = sbr.rel (%p300) target = $region40
        $region39: #{tpu_custom_call.1} parent=35 // pred_region
          %303 = dma.done %s296, 256
        $region40: #{tpu_custom_call.1} parent=35 // pred_fallthru
          _
        // Predicated region
        $region41: #{tpu_custom_call.1} parent=35 // pred_check
          %p304 = pneg %p70
        $region42: #{tpu_custom_call.1} parent=35 // pred_check_branch
          %306 = sbr.rel (%p304) target = $region44
        $region43: #{tpu_custom_call.1} parent=35 // pred_region
          %307 = dma.done [#allocation6], 2560
        $region44: #{tpu_custom_call.1} parent=35 // pred_fallthru
          _
        %s308 = sand.u32 %s28, 1
        %s309 = scalar_lea.sflag [#allocation3], %s308
        %s310 = sand.u32 %s83, 1
        %s311 = smul.addr %s310, 8
        %s312 = scalar_lea.vmem [#allocation7], %s311
        // Predicated region
        $region45: #{tpu_custom_call.1} parent=35 // pred_check
          %p313 = pneg %p96
        $region46: #{tpu_custom_call.1} parent=35 // pred_check_branch
          %315 = sbr.rel (%p313) target = $region48
        $region47: #{tpu_custom_call.1} parent=35 // pred_region
          %316 = dma.done %s309, 128
        $region48: #{tpu_custom_call.1} parent=35 // pred_fallthru
          _
        %s317 = sand.u32 %s28, 1
        %s318 = scalar_lea.sflag [#allocation3], %s317
        %s319 = sand.u32 %s109, 1
        %s320 = smul.addr %s319, 8
        %s321 = scalar_lea.vmem [#allocation8], %s320
        // Predicated region
        $region49: #{tpu_custom_call.1} parent=35 // pred_check
          %p322 = pneg %p122
        $region50: #{tpu_custom_call.1} parent=35 // pred_check_branch
          %324 = sbr.rel (%p322) target = $region52
        $region51: #{tpu_custom_call.1} parent=35 // pred_region
          %325 = dma.done %s318, 128
        $region52: #{tpu_custom_call.1} parent=35 // pred_fallthru
          _
        %s326 = sand.u32 %s28, 1
        %s327 = scalar_lea.sflag [#allocation3], %s326
        %s328 = sand.u32 %s36, 1
        %s329 = smul.addr %s328, 16
        %s330 = scalar_lea.vmem [#allocation2], %s329
        %p331 = pneg %p49
        %p332 = pneg %p46
        %p333 = pneg %p70
        %p334 = pneg %p67
        %s335 = sand.u32 %s28, 1
        %s336 = scalar_lea.sflag [#allocation3], %s335
        %s337 = sand.u32 %s83, 1
        %s338 = smul.addr %s337, 8
        %s339 = scalar_lea.vmem [#allocation7], %s338
        %p340 = pneg %p96
        %p341 = pneg %p93
        %s342 = sand.u32 %s28, 1
        %s343 = scalar_lea.sflag [#allocation3], %s342
        %s344 = sand.u32 %s109, 1
        %s345 = smul.addr %s344, 8
        %s346 = scalar_lea.vmem [#allocation8], %s345
        %p347 = pneg %p122
        %p348 = pneg %p119
        %p349 = pneg %p148
        %p350 = pneg %p145
        %s351 = sand.u32 %s135, 1
        %s352 = scalar_lea.sflag [#allocation4], %s351
        %s353 = sand.u32 %s135, 1
        %s354 = smul.addr %s353, 16
        %s355 = scalar_lea.vmem [#allocation9], %s354
        %p356 = pneg %p174
        %p357 = pneg %p171
        %s358 = sand.u32 %s28, 1
        %s359 = scalar_lea.sflag [#allocation11], %s358
        %s360 = sand.u32 %s161, 1
        %s361 = smul.addr %s360, 16
        %s362 = scalar_lea.vmem [#allocation10], %s361
        %p363 = pneg %p200
        %p364 = pneg %p197
        %s365 = sand.u32 %s28, 1
        %s366 = scalar_lea.sflag [#allocation11], %s365
        %s367 = sand.u32 %s187, 1
        %s368 = smul.addr %s367, 16
        %s369 = scalar_lea.vmem [#allocation12], %s368
        %v370 = vld [vmem:[%s299] sm:$0xff]
        %v371 = vld [vmem:[%s299 + $0x8] sm:$0xff]
        %v372 = vld [vmem:[#allocation5] sm:$0xff]
        %v373 = vld [vmem:[#allocation5 + $0x8] sm:$0xff]
        %v374 = vld [vmem:[#allocation5 + $0x10] sm:$0xff]
        %v375 = vld [vmem:[#allocation5 + $0x18] sm:$0xff]
        %v376 = vld [vmem:[#allocation5 + $0x20] sm:$0xff]
        %v377 = vld [vmem:[#allocation5 + $0x28] sm:$0xff]
        %v378 = vld [vmem:[#allocation5 + $0x30] sm:$0xff]
        %v379 = vld [vmem:[#allocation5 + $0x38] sm:$0xff]
        %v380 = vld [vmem:[#allocation5 + $0x40] sm:$0xff]
        %v381 = vld [vmem:[#allocation5 + $0x48] sm:$0xff]
        %v382 = vld [vmem:[#allocation5 + $0x50] sm:$0xff]
        %v383 = vld [vmem:[#allocation5 + $0x58] sm:$0xff]
        %v384 = vld [vmem:[#allocation5 + $0x60] sm:$0xff]
        %v385 = vld [vmem:[#allocation5 + $0x68] sm:$0xff]
        %v386 = vld [vmem:[#allocation5 + $0x70] sm:$0xff]
        %v387 = vld [vmem:[#allocation5 + $0x78] sm:$0xff]
        %v388 = vld [vmem:[#allocation5 + $0x80] sm:$0xff]
        %v389 = vld [vmem:[#allocation5 + $0x88] sm:$0xff]
        %v390 = vld [vmem:[#allocation5 + $0x90] sm:$0xff]
        %v391 = vld [vmem:[#allocation5 + $0x98] sm:$0xff]
        %vm392 = vcmask 261120
        %v394 = vsel %vm392, %v370, 0
        %v397 = vsel %vm392, %v371, 0
        %399 = vmatprep.subr.mxu0 0.0
        %400 = vmatpush1.msra.mxu0 0.0
        %401 = vmatprep.subr.mxu0 0.0
        %402 = vmatpush1.msra.mxu0 0.0
        %403 = vmatprep.subr.mxu0 0.0
        %404 = vmatpush1.msra.mxu0 0.0
        %405 = vmatprep.subr.mxu0 0.0
        %406 = vmatpush1.msra.mxu0 0.0
        %407 = vmatprep.subr.mxu0 0.0
        %408 = vmatpush1.msra.mxu0 0.0
        %409 = vmatprep.subr.mxu0 0.0
        %410 = vmatpush1.msra.mxu0 0.0
        %411 = vmatprep.subr.mxu0 0.0
        %412 = vmatpush1.msra.mxu0 0.0
        %413 = vmatprep.subr.mxu0 0.0
        %414 = vmatpush1.msra.mxu0 0.0
        %415 = vmatprep.subr.mxu0 0.0
        %416 = vmatpush1.msra.mxu0 0.0
        %417 = vmatprep.subr.mxu0 0.0
        %418 = vmatpush1.msra.mxu0 0.0
        %419 = vmatprep.subr.mxu0 0.0
        %420 = vmatpush1.msra.mxu0 0.0
        %421 = vmatprep.subr.mxu0 0.0
        %422 = vmatpush1.msra.mxu0 0.0
        %423 = vmatprep.subr.mxu0 %v388
        %424 = vmatpush1.msra.mxu0 %v387
        %425 = vmatprep.subr.mxu0 %v383
        %426 = vmatpush1.msra.mxu0 %v382
        %427 = vmatprep.subr.mxu0 %v378
        %428 = vmatpush1.msra.mxu0 %v377
        %429 = vmatprep.subr.mxu0 %v373
        %430 = vmatpush1.msra.mxu0 %v372
        %431 = vmatprep.subr.mxu0 0.0
        %432 = vmatpush2.msra.mxu0 0.0
        %433 = vmatprep.subr.mxu0 0.0
        %434 = vmatpush2.msra.mxu0 0.0
        %435 = vmatprep.subr.mxu0 0.0
        %436 = vmatpush2.msra.mxu0 0.0
        %437 = vmatprep.subr.mxu0 0.0
        %438 = vmatpush2.msra.mxu0 0.0
        %439 = vmatprep.subr.mxu0 0.0
        %440 = vmatpush2.msra.mxu0 0.0
        %441 = vmatprep.subr.mxu0 0.0
        %442 = vmatpush2.msra.mxu0 0.0
        %443 = vmatprep.subr.mxu0 0.0
        %444 = vmatpush2.msra.mxu0 0.0
        %445 = vmatprep.subr.mxu0 0.0
        %446 = vmatpush2.msra.mxu0 0.0
        %447 = vmatprep.subr.mxu0 0.0
        %448 = vmatpush2.msra.mxu0 0.0
        %449 = vmatprep.subr.mxu0 0.0
        %450 = vmatpush2.msra.mxu0 0.0
        %451 = vmatprep.subr.mxu0 0.0
        %452 = vmatpush2.msra.mxu0 0.0
        %453 = vmatprep.subr.mxu0 0.0
        %454 = vmatpush2.msra.mxu0 0.0
        %455 = vmatprep.subr.mxu0 0.0
        %456 = vmatpush2.msra.mxu0 0.0
        %457 = vmatprep.subr.mxu0 0.0
        %458 = vmatpush2.msra.mxu0 0.0
        %459 = vmatprep.subr.mxu0 0.0
        %460 = vmatpush2.msra.mxu0 0.0
        %461 = vmatprep.subr.mxu0 0.0
        %462 = vmatpush2.msra.mxu0 0.0
        %463 = vmatprep.mubr.f32.mxu0 0.0
        %464 = vmatmul.mubr.f32.gmra.mxu0 %v394
        %v465 = vpop.f32.mrf.mxu0
        %v466 = vadd.f32 0.0, %v465
        %v467 = vpop.f32.mrf.mxu0
        %v468 = vadd.f32 0.0, %v467
        %469 = vmatprep.mubr.f32.mxu0 0.0
        %470 = vmatmul.mubr.f32.gmra.mxu0 %v397
        %v471 = vpop.f32.mrf.mxu0
        %v472 = vadd.f32 0.0, %v471
        %v473 = vpop.f32.mrf.mxu0
        %v474 = vadd.f32 0.0, %v473
        %475 = vdwg.mxu0
        %476 = vmatprep.subr.mxu0 0.0
        %477 = vmatpush1.msra.mxu0 0.0
        %478 = vmatprep.subr.mxu0 0.0
        %479 = vmatpush1.msra.mxu0 0.0
        %480 = vmatprep.subr.mxu0 0.0
        %481 = vmatpush1.msra.mxu0 0.0
        %482 = vmatprep.subr.mxu0 0.0
        %483 = vmatpush1.msra.mxu0 0.0
        %484 = vmatprep.subr.mxu0 0.0
        %485 = vmatpush1.msra.mxu0 0.0
        %486 = vmatprep.subr.mxu0 0.0
        %487 = vmatpush1.msra.mxu0 0.0
        %488 = vmatprep.subr.mxu0 0.0
        %489 = vmatpush1.msra.mxu0 0.0
        %490 = vmatprep.subr.mxu0 0.0
        %491 = vmatpush1.msra.mxu0 0.0
        %492 = vmatprep.subr.mxu0 0.0
        %493 = vmatpush1.msra.mxu0 0.0
        %494 = vmatprep.subr.mxu0 0.0
        %495 = vmatpush1.msra.mxu0 0.0
        %496 = vmatprep.subr.mxu0 0.0
        %497 = vmatpush1.msra.mxu0 0.0
        %498 = vmatprep.subr.mxu0 0.0
        %499 = vmatpush1.msra.mxu0 0.0
        %500 = vmatprep.subr.mxu0 %v390
        %501 = vmatpush1.msra.mxu0 %v389
        %502 = vmatprep.subr.mxu0 %v385
        %503 = vmatpush1.msra.mxu0 %v384
        %504 = vmatprep.subr.mxu0 %v380
        %505 = vmatpush1.msra.mxu0 %v379
        %506 = vmatprep.subr.mxu0 %v375
        %507 = vmatpush1.msra.mxu0 %v374
        %508 = vmatprep.subr.mxu0 0.0
        %509 = vmatpush2.msra.mxu0 0.0
        %510 = vmatprep.subr.mxu0 0.0
        %511 = vmatpush2.msra.mxu0 0.0
        %512 = vmatprep.subr.mxu0 0.0
        %513 = vmatpush2.msra.mxu0 0.0
        %514 = vmatprep.subr.mxu0 0.0
        %515 = vmatpush2.msra.mxu0 0.0
        %516 = vmatprep.subr.mxu0 0.0
        %517 = vmatpush2.msra.mxu0 0.0
        %518 = vmatprep.subr.mxu0 0.0
        %519 = vmatpush2.msra.mxu0 0.0
        %520 = vmatprep.subr.mxu0 0.0
        %521 = vmatpush2.msra.mxu0 0.0
        %522 = vmatprep.subr.mxu0 0.0
        %523 = vmatpush2.msra.mxu0 0.0
        %524 = vmatprep.subr.mxu0 0.0
        %525 = vmatpush2.msra.mxu0 0.0
        %526 = vmatprep.subr.mxu0 0.0
        %527 = vmatpush2.msra.mxu0 0.0
        %528 = vmatprep.subr.mxu0 0.0
        %529 = vmatpush2.msra.mxu0 0.0
        %530 = vmatprep.subr.mxu0 0.0
        %531 = vmatpush2.msra.mxu0 0.0
        %532 = vmatprep.subr.mxu0 0.0
        %533 = vmatpush2.msra.mxu0 0.0
        %534 = vmatprep.subr.mxu0 0.0
        %535 = vmatpush2.msra.mxu0 0.0
        %536 = vmatprep.subr.mxu0 0.0
        %537 = vmatpush2.msra.mxu0 0.0
        %538 = vmatprep.subr.mxu0 0.0
        %539 = vmatpush2.msra.mxu0 0.0
        %540 = vmatprep.mubr.f32.mxu0 0.0
        %541 = vmatmul.mubr.f32.gmra.mxu0 %v394
        %v542 = vpop.f32.mrf.mxu0
        %v543 = vadd.f32 0.0, %v542
        %v544 = vpop.f32.mrf.mxu0
        %v545 = vadd.f32 0.0, %v544
        %546 = vmatprep.mubr.f32.mxu0 0.0
        %547 = vmatmul.mubr.f32.gmra.mxu0 %v397
        %v548 = vpop.f32.mrf.mxu0
        %v549 = vadd.f32 0.0, %v548
        %v550 = vpop.f32.mrf.mxu0
        %v551 = vadd.f32 0.0, %v550
        %552 = vdwg.mxu0
        %553 = vmatprep.subr.mxu0 0.0
        %554 = vmatpush1.msra.mxu0 0.0
        %555 = vmatprep.subr.mxu0 0.0
        %556 = vmatpush1.msra.mxu0 0.0
        %557 = vmatprep.subr.mxu0 0.0
        %558 = vmatpush1.msra.mxu0 0.0
        %559 = vmatprep.subr.mxu0 0.0
        %560 = vmatpush1.msra.mxu0 0.0
        %561 = vmatprep.subr.mxu0 0.0
        %562 = vmatpush1.msra.mxu0 0.0
        %563 = vmatprep.subr.mxu0 0.0
        %564 = vmatpush1.msra.mxu0 0.0
        %565 = vmatprep.subr.mxu0 0.0
        %566 = vmatpush1.msra.mxu0 0.0
        %567 = vmatprep.subr.mxu0 0.0
        %568 = vmatpush1.msra.mxu0 0.0
        %569 = vmatprep.subr.mxu0 0.0
        %570 = vmatpush1.msra.mxu0 0.0
        %571 = vmatprep.subr.mxu0 0.0
        %572 = vmatpush1.msra.mxu0 0.0
        %573 = vmatprep.subr.mxu0 0.0
        %574 = vmatpush1.msra.mxu0 0.0
        %575 = vmatprep.subr.mxu0 0.0
        %576 = vmatpush1.msra.mxu0 0.0
        %577 = vmatprep.subr.mxu0 0.0
        %578 = vmatpush1.msra.mxu0 %v391
        %579 = vmatprep.subr.mxu0 0.0
        %580 = vmatpush1.msra.mxu0 %v386
        %581 = vmatprep.subr.mxu0 0.0
        %582 = vmatpush1.msra.mxu0 %v381
        %583 = vmatprep.subr.mxu0 0.0
        %584 = vmatpush1.msra.mxu0 %v376
        %585 = vmatprep.subr.mxu0 0.0
        %586 = vmatpush2.msra.mxu0 0.0
        %587 = vmatprep.subr.mxu0 0.0
        %588 = vmatpush2.msra.mxu0 0.0
        %589 = vmatprep.subr.mxu0 0.0
        %590 = vmatpush2.msra.mxu0 0.0
        %591 = vmatprep.subr.mxu0 0.0
        %592 = vmatpush2.msra.mxu0 0.0
        %593 = vmatprep.subr.mxu0 0.0
        %594 = vmatpush2.msra.mxu0 0.0
        %595 = vmatprep.subr.mxu0 0.0
        %596 = vmatpush2.msra.mxu0 0.0
        %597 = vmatprep.subr.mxu0 0.0
        %598 = vmatpush2.msra.mxu0 0.0
        %599 = vmatprep.subr.mxu0 0.0
        %600 = vmatpush2.msra.mxu0 0.0
        %601 = vmatprep.subr.mxu0 0.0
        %602 = vmatpush2.msra.mxu0 0.0
        %603 = vmatprep.subr.mxu0 0.0
        %604 = vmatpush2.msra.mxu0 0.0
        %605 = vmatprep.subr.mxu0 0.0
        %606 = vmatpush2.msra.mxu0 0.0
        %607 = vmatprep.subr.mxu0 0.0
        %608 = vmatpush2.msra.mxu0 0.0
        %609 = vmatprep.subr.mxu0 0.0
        %610 = vmatpush2.msra.mxu0 0.0
        %611 = vmatprep.subr.mxu0 0.0
        %612 = vmatpush2.msra.mxu0 0.0
        %613 = vmatprep.subr.mxu0 0.0
        %614 = vmatpush2.msra.mxu0 0.0
        %615 = vmatprep.subr.mxu0 0.0
        %616 = vmatpush2.msra.mxu0 0.0
        %617 = vmatprep.mubr.f32.mxu0 0.0
        %618 = vmatmul.mubr.f32.gmra.mxu0 %v394
        %v619 = vpop.f32.mrf.mxu0
        %v620 = vadd.f32 0.0, %v619
        %v621 = vpop.f32.mrf.mxu0
        %622 = vmatprep.mubr.f32.mxu0 0.0
        %623 = vmatmul.mubr.f32.gmra.mxu0 %v397
        %v624 = vpop.f32.mrf.mxu0
        %v625 = vadd.f32 0.0, %v624
        %v626 = vpop.f32.mrf.mxu0
        %627 = vdwg.mxu0
        %v628 = vld [vmem:[%s312] sm:$0xff]
        %v629 = vld [vmem:[%s321] sm:$0xff]
        %v630 = vmul.f32 %v466, %v628
        %v631 = vmul.f32 %v472, %v628
        %v632 = vmul.f32 %v545, %v629
        %v633 = vmul.f32 %v551, %v629
        %v634 = vadd.f32 %v630, %v632
        %v635 = vadd.f32 %v631, %v633
        %v636 = vmul.f32 %v634, 0.17677669
        %v637 = vmul.f32 %v635, 0.17677669
        %638 = vst [vmem:[%s355] sm:$0xff] %v636
        %639 = vst [vmem:[%s355 + $0x8] sm:$0xff] %v637
        %v640 = vmul.f32 %v468, %v628
        %v641 = vmul.f32 %v474, %v628
        %v642 = vmul.f32 %v620, %v629
        %v643 = vmul.f32 %v625, %v629
        %v644 = vadd.f32 %v640, %v642
        %v645 = vadd.f32 %v641, %v643
        %646 = vst [vmem:[%s362] sm:$0xff] %v644
        %647 = vst [vmem:[%s362 + $0x8] sm:$0xff] %v645
        %648 = vst [vmem:[%s369] sm:$0xff] %v543
        %649 = vst [vmem:[%s369 + $0x8] sm:$0xff] %v549
        %s650 = sand.u32 %s135, 1
        %s651 = scalar_lea.sflag [#allocation4], %s650
        %s652 = sand.u32 %s135, 1
        %s653 = smul.addr %s652, 16
        %s654 = scalar_lea.vmem [#allocation9], %s653
        %s655 = sand.u32 %s28, 1
        %s656 = scalar_lea.sflag [#allocation11], %s655
        %s657 = sand.u32 %s161, 1
        %s658 = smul.addr %s657, 16
        %s659 = scalar_lea.vmem [#allocation10], %s658
        %s660 = sand.u32 %s28, 1
        %s661 = scalar_lea.sflag [#allocation11], %s660
        %s662 = sand.u32 %s187, 1
        %s663 = smul.addr %s662, 16
        %s664 = scalar_lea.vmem [#allocation12], %s663
        // Predicated region
        $region53: #{tpu_custom_call.1} parent=35 // pred_check
          %p665 = pneg %p145
        $region54: #{tpu_custom_call.1} parent=35 // pred_check_branch
          %667 = sbr.rel (%p665) target = $region56
        $region55: #{tpu_custom_call.1} parent=35 // pred_region
          %s669 = ssub.s32 256, 256
          %670 = vsyncadd %s651, %s669
          %s671 = smul.addr %s28, 128
          %s672 = scalar_lea.hbm %s4, %s671
          %s673 = sshll.u32 %s654, 4
          %s674 = int_to_ptr.vmem [resolvable:$true] %s673
          %679 = dma.vmem_to_hbm [thread:$0]  %s674, 256, %s672, %s651, 128, 256, 8
        $region56: #{tpu_custom_call.1} parent=35 // pred_fallthru
          _
        // Predicated region
        $region57: #{tpu_custom_call.1} parent=35 // pred_check
          %p680 = pneg %p171
        $region58: #{tpu_custom_call.1} parent=35 // pred_check_branch
          %682 = sbr.rel (%p680) target = $region60
        $region59: #{tpu_custom_call.1} parent=35 // pred_region
          %s684 = ssub.s32 256, 256
          %685 = vsyncadd %s656, %s684
          %s686 = smul.addr %s28, 128
          %s687 = scalar_lea.hbm %s5, %s686
          %s688 = sshll.u32 %s659, 4
          %s689 = int_to_ptr.vmem [resolvable:$true] %s688
          %694 = dma.vmem_to_hbm [thread:$0]  %s689, 256, %s687, %s656, 128, 256, 8
        $region60: #{tpu_custom_call.1} parent=35 // pred_fallthru
          _
        // Predicated region
        $region61: #{tpu_custom_call.1} parent=35 // pred_check
          %p695 = pneg %p197
        $region62: #{tpu_custom_call.1} parent=35 // pred_check_branch
          %697 = sbr.rel (%p695) target = $region64
        $region63: #{tpu_custom_call.1} parent=35 // pred_region
          %s699 = ssub.s32 256, 256
          %700 = vsyncadd %s661, %s699
          %s701 = smul.addr %s28, 128
          %s702 = scalar_lea.hbm %s6, %s701
          %s703 = sshll.u32 %s664, 4
          %s704 = int_to_ptr.vmem [resolvable:$true] %s703
          %709 = dma.vmem_to_hbm [thread:$0]  %s704, 256, %s702, %s661, 128, 256, 8
        $region64: #{tpu_custom_call.1} parent=35 // pred_fallthru
          _
      $region36: #{tpu_custom_call.1} parent=5 // pred_fallthru
        _
      %p710 = scmp.le.s32.totalorder 2, %s23
      // Predicated region
      $region65: #{tpu_custom_call.1} parent=5 // pred_check
        %p711 = pneg %p710
      $region66: #{tpu_custom_call.1} parent=5 // pred_check_branch
        %713 = sbr.rel (%p711) target = $region68
      $region67: #{tpu_custom_call.1} parent=5 // pred_region
        %s714 = ssub.s32 %s23, 2
        // Predicated region
        $region69: #{tpu_custom_call.1} parent=67 // pred_check
          %p715 = pneg %p151
        $region70: #{tpu_custom_call.1} parent=67 // pred_check_branch
          %717 = sbr.rel (%p715) target = $region72
        $region71: #{tpu_custom_call.1} parent=67 // pred_region
          %s718 = sand.u32 %s136, 1
          %s719 = scalar_lea.sflag [#allocation4], %s718
          %s720 = sand.u32 %s136, 1
          %s721 = smul.addr %s720, 16
          %s722 = scalar_lea.vmem [#allocation9], %s721
          %723 = dma.done %s719, 256
        $region72: #{tpu_custom_call.1} parent=67 // pred_fallthru
          _
        // Predicated region
        $region73: #{tpu_custom_call.1} parent=67 // pred_check
          %p724 = pneg %p177
        $region74: #{tpu_custom_call.1} parent=67 // pred_check_branch
          %726 = sbr.rel (%p724) target = $region76
        $region75: #{tpu_custom_call.1} parent=67 // pred_region
          %s727 = sand.u32 %s29, 1
          %s728 = scalar_lea.sflag [#allocation11], %s727
          %s729 = sand.u32 %s162, 1
          %s730 = smul.addr %s729, 16
          %s731 = scalar_lea.vmem [#allocation10], %s730
          %732 = dma.done %s728, 256
        $region76: #{tpu_custom_call.1} parent=67 // pred_fallthru
          _
        // Predicated region
        $region77: #{tpu_custom_call.1} parent=67 // pred_check
          %p733 = pneg %p203
        $region78: #{tpu_custom_call.1} parent=67 // pred_check_branch
          %735 = sbr.rel (%p733) target = $region80
        $region79: #{tpu_custom_call.1} parent=67 // pred_region
          %s736 = sand.u32 %s29, 1
          %s737 = scalar_lea.sflag [#allocation11], %s736
          %s738 = sand.u32 %s188, 1
          %s739 = smul.addr %s738, 16
          %s740 = scalar_lea.vmem [#allocation12], %s739
          %741 = dma.done %s737, 256
        $region80: #{tpu_custom_call.1} parent=67 // pred_fallthru
          _
      $region68: #{tpu_custom_call.1} parent=5 // pred_fallthru
        _
    $region6: #{tpu_custom_call.1} parent=1 // loop_footer
      %s27 = sadd.s32 1, %s23
    $region7: #{tpu_custom_call.1} parent=1 // loop_footer_branch
      %22 = sbr.rel target = $region3
    $region8: #{tpu_custom_call.1} parent=1 // loop_exit
      _
    %742 = vsyncpa [#allocation3], 1
    %s743 = scalar_lea.sflag [#allocation3], 1
    %744 = vsyncpa %s743, 1
    %745 = vsyncpa [#allocation6], 1
    %746 = vsyncpa [#allocation4], 1
    %s747 = scalar_lea.sflag [#allocation4], 1
    %748 = vsyncpa %s747, 1
    %749 = vsyncpa [#allocation11], 1
    %s750 = scalar_lea.sflag [#allocation11], 1
    %751 = vsyncpa %s750, 1

</llo_original>
